<compile_context>
chip_gen: v6e
topology: v6e:2x2x1
jax: 0.10.0
libtpu: 0.0.40
codegen_flags: <defaults>
</compile_context>

<pallas_src>
import functools

import jax
import jax.numpy as jnp
from jax.experimental import pallas as pl
from jax.experimental.pallas import tpu as pltpu

LANE = 128


def _unbiased_ce_kernel(logits_ref, labels_ref, loss_ref, cnt_ref, *,
                        old_cl, num_classes, ignore_index):
    """One (C, ts, 128) logits tile + (1, ts, 128) labels tile -> (1,128) partials."""
    p = pl.program_id(2)

    @pl.when(p == 0)
    def _init():
        loss_ref[...] = jnp.zeros_like(loss_ref)
        cnt_ref[...] = jnp.zeros_like(cnt_ref)

    lab = labels_ref[0]                                  # (ts, 128) int32
    valid = lab != ignore_index                          # (ts, 128) bool

    # ---- pass 1: per-group channel maxima (pure VPU max over channel slabs) ----
    m_old = logits_ref[0].astype(jnp.float32)
    for c in range(1, old_cl):
        m_old = jnp.maximum(m_old, logits_ref[c].astype(jnp.float32))
    m_new = logits_ref[old_cl].astype(jnp.float32)
    for c in range(old_cl + 1, num_classes):
        m_new = jnp.maximum(m_new, logits_ref[c].astype(jnp.float32))

    # ---- pass 2 (fused): group exp-sums + one-hot gather of inputs[label] ----
    old_sum = jnp.zeros_like(m_old)
    new_sum = jnp.zeros_like(m_new)
    picked = jnp.zeros_like(m_new)
    for c in range(num_classes):
        x_c = logits_ref[c].astype(jnp.float32)          # per-slab cast, not whole block
        if c < old_cl:
            old_sum = old_sum + jnp.exp(x_c - m_old)
        else:
            new_sum = new_sum + jnp.exp(x_c - m_new)
            picked = jnp.where(lab == c, x_c, picked)    # only new-class labels need it

    # Stable merge of the two group logsumexps (each scaled by its own max).
    m = jnp.maximum(m_old, m_new)
    den = m + jnp.log(old_sum * jnp.exp(m_old - m) + new_sum * jnp.exp(m_new - m))
    lse_old = m_old + jnp.log(old_sum)

    loss = jnp.where(lab < old_cl, den - lse_old, den - picked)
    loss = jnp.where(valid, loss, 0.0)       # select (not multiply) -> NaN/garbage safe

    # One sublane reduce per step; accumulate into the resident (1,128) output block.
    loss_ref[...] += jnp.sum(loss, axis=0, keepdims=True)
    cnt_ref[...] += jnp.sum(valid.astype(jnp.int32), axis=0, keepdims=True)


def unbiased_cross_entropy(inputs, targets, *, old_cl, mask=None,
                           reduction="mean", ignore_index=255, pixel_tile=None):
    """Pallas implementation of UnbiasedCrossEntropy.forward (reduction mean/sum)."""
    assert reduction in ("mean", "sum")
    # TODO(synk): reduction='none' (per-pixel loss map output) not wired up here.
    N, C, H, W = inputs.shape
    assert 0 < old_cl < C, "old_cl must split the channel axis into two non-empty groups"
    assert ignore_index < 0 or ignore_index >= C, \
        "ignore_index inside [0, C) is not supported (diverges from the PyTorch module)"
    HW = H * W

    if mask is not None:
        targets = jnp.where(mask, ignore_index, targets)
    labels = targets.astype(jnp.int32)

    rows = pl.cdiv(HW, LANE)                 # pixel rows of 128 lanes per image

    # ---------------- generation-aware tile sizing ----------------
    try:
        info = pltpu.get_tpu_info()
        vmem_cap = int(getattr(info, "vmem_capacity_bytes", 0)) or 128 * 1024 * 1024
    except Exception:  # pragma: no cover - CPU interpret / older jax
        vmem_cap = 128 * 1024 * 1024
    if vmem_cap <= 80 * 1024 * 1024:         # v7x-class: 64 MiB VMEM per TensorCore
        work_budget = 36 * 1024 * 1024
        vmem_limit = 48 * 1024 * 1024
        default_rows = 2048                  # ~3.2 TB/s HBM: bigger tile amortizes step cost
    else:                                    # v5e / v6e: 128 MiB VMEM
        work_budget = 48 * 1024 * 1024
        vmem_limit = 64 * 1024 * 1024
        default_rows = 1024

    itemsize = jnp.dtype(inputs.dtype).itemsize
    # Per 128-lane pixel row of live VMEM:
    #   2x double-buffered logits block  + 2x double-buffered labels block
    #   + ~12 fp32 in-kernel temporaries (m_old, m_new, sums, picked, x_c, exp, ...)
    bytes_per_row = LANE * (2 * C * itemsize + 2 * 4 + 12 * 4)
    ts_cap = max(8, (work_budget // bytes_per_row) // 8 * 8)

    target_rows = default_rows if pixel_tile is None else max(1, pixel_tile // LANE)
    ts = min(rows, target_rows, ts_cap)
    if ts < rows:                            # (8,128) rule: multiple of 8 unless full dim
        ts = max(8, (ts // 8) * 8)
        ts = min(ts, rows)

    steps = pl.cdiv(rows, ts)
    n_chunks = 2 if steps >= 2 else 1        # 2nd parallel axis -> both v7x TCs busy
    tiles_per_chunk = pl.cdiv(steps, n_chunks)
    rows_total = n_chunks * tiles_per_chunk * ts
    last_row_blk = steps - 1

    # ---------------- reshape-only layout ----------------
    # Logits: pad lanes to a 128 multiple only (no extra pass over the big array).
    x = inputs.reshape(N, C, HW)
    pad_x = rows * LANE - HW
    if pad_x:
        x = jnp.pad(x, ((0, 0), (0, 0), (0, pad_x)))
    x = x.reshape(N, C, rows, LANE)

    # Labels: pad to the full chunked row extent with ignore_index so every lane the
    # kernel evaluates has a well-defined label.  Out-of-bounds logits lanes are then
    # masked purely by label == ignore_index (no per-step iota / in_range compare).
    lab = labels.reshape(N, 1, HW)
    pad_l = rows_total * LANE - HW
    if pad_l:
        lab = jnp.pad(lab, ((0, 0), (0, 0), (0, pad_l)),
                      constant_values=ignore_index)
    lab = lab.reshape(N, 1, rows_total, LANE)

    def logits_map(n, k, p):
        # Clamp so we never schedule a fully out-of-bounds logits block; the re-read
        # block's contribution is zeroed because its labels are ignore_index.
        return (n, 0, jnp.minimum(k * tiles_per_chunk + p, last_row_blk), 0)

    def labels_map(n, k, p):
        return (n, 0, k * tiles_per_chunk + p, 0)

    def out_map(n, k, p):
        return (n, k, 0, 0)

    kernel = functools.partial(_unbiased_ce_kernel, old_cl=old_cl,
                               num_classes=C, ignore_index=ignore_index)

    loss_parts, cnt_parts = pl.pallas_call(
        kernel,
        out_shape=(jax.ShapeDtypeStruct((N, n_chunks, 1, LANE), jnp.float32),
                   jax.ShapeDtypeStruct((N, n_chunks, 1, LANE), jnp.int32)),
        grid_spec=pltpu.PrefetchScalarGridSpec(
            num_scalar_prefetch=0,
            grid=(N, n_chunks, tiles_per_chunk),
            in_specs=[
                pl.BlockSpec((None, C, ts, LANE), logits_map),
                pl.BlockSpec((None, 1, ts, LANE), labels_map),
            ],
            out_specs=[
                pl.BlockSpec((None, None, 1, LANE), out_map),
                pl.BlockSpec((None, None, 1, LANE), out_map),
            ],
        ),
        compiler_params=pltpu.CompilerParams(
            dimension_semantics=("parallel", "parallel", "arbitrary"),
            vmem_limit_bytes=vmem_limit),
    )(x, lab)

    total = jnp.sum(loss_parts)
    if reduction == "sum":
        return total
    # Matches torch nll_loss: divides by #valid pixels (NaN if every pixel ignored).
    return total / jnp.sum(cnt_parts).astype(jnp.float32)


def _reference(inputs, targets, *, old_cl, mask=None, reduction="mean",
               ignore_index=255):
    """Pure-JAX reference mirroring the PyTorch module."""
    den = jax.nn.logsumexp(inputs, axis=1)                        # (N,H,W)
    outputs = jnp.zeros_like(inputs)
    outputs = outputs.at[:, 0].set(
        jax.nn.logsumexp(inputs[:, :old_cl], axis=1) - den)
    outputs = outputs.at[:, old_cl:].set(inputs[:, old_cl:] - den[:, None])
    labels = jnp.where(targets < old_cl, 0, targets)
    if mask is not None:
        labels = jnp.where(mask, ignore_index, labels)
    valid = labels != ignore_index
    safe = jnp.where(valid, labels, 0)
    nll = -jnp.take_along_axis(outputs, safe[:, None], axis=1)[:, 0]
    nll = jnp.where(valid, nll, 0.0)
    if reduction == "mean":
        return jnp.sum(nll) / jnp.sum(valid)
    return jnp.sum(nll)


if __name__ == "__main__":
    key = jax.random.PRNGKey(0)

    # --- case 1: small, HW multiple of 128, no mask, mean & sum ---
    k1, k2 = jax.random.split(key)
    N, C, H, W, old_cl, ignore_index = 2, 4, 16, 16, 2, 255
    inputs = jax.random.normal(k1, (N, C, H, W), dtype=jnp.float32)
    classes = jax.random.randint(k2, (N, H, W), 0, C, dtype=jnp.int32)
    targets = classes

    out_mean = jax.block_until_ready(unbiased_cross_entropy(
        inputs, targets, old_cl=old_cl, reduction="mean", ignore_index=ignore_index))
    ref_mean = _reference(inputs, targets, old_cl=old_cl, reduction="mean",
                          ignore_index=ignore_index)
    assert jnp.allclose(out_mean, ref_mean, rtol=1e-5, atol=1e-5), (out_mean, ref_mean)

    out_sum = jax.block_until_ready(unbiased_cross_entropy(
        inputs, targets, old_cl=old_cl, reduction="sum", ignore_index=ignore_index))
    ref_sum = _reference(inputs, targets, old_cl=old_cl, reduction="sum",
                         ignore_index=ignore_index)
    assert jnp.allclose(out_sum, ref_sum, rtol=1e-5, atol=1e-4), (out_sum, ref_sum)

    # --- case 2: HW not a multiple of 128 + mask (exercises the padded tail) ---
    k1, k2, k3 = jax.random.split(jax.random.PRNGKey(1), 3)
    N, C, H, W, old_cl = 2, 4, 12, 12, 2
    inputs = jax.random.normal(k1, (N, C, H, W), dtype=jnp.float32)
    classes = jax.random.randint(k2, (N, H, W), 0, C, dtype=jnp.int32)
    ign_mask = jax.random.uniform(k3, (N, H, W)) < 0.2
    targets = jnp.where(ign_mask, ignore_index, classes).astype(jnp.int32)

    out2 = jax.block_until_ready(unbiased_cross_entropy(
        inputs, targets, old_cl=old_cl, reduction="mean", ignore_index=ignore_index))
    ref2 = _reference(inputs, targets, old_cl=old_cl, reduction="mean",
                      ignore_index=ignore_index)
    assert jnp.allclose(out2, ref2, rtol=1e-5, atol=1e-5), (out2, ref2)

    # --- case 3: multi-step grid + 2 parallel chunks + clamped tail block ---
    k1, k2, k3 = jax.random.split(jax.random.PRNGKey(2), 3)
    N, C, H, W, old_cl = 2, 6, 48, 48, 3
    inputs = jax.random.normal(k1, (N, C, H, W), dtype=jnp.float32)
    classes = jax.random.randint(k2, (N, H, W), 0, C, dtype=jnp.int32)
    msk = jax.random.uniform(k3, (N, H, W)) < 0.3
    targets = classes

    out3m = jax.block_until_ready(unbiased_cross_entropy(
        inputs, targets, old_cl=old_cl, mask=msk, reduction="mean",
        ignore_index=ignore_index, pixel_tile=1024))
    ref3m = _reference(inputs, targets, old_cl=old_cl, mask=msk, reduction="mean",
                       ignore_index=ignore_index)
    assert jnp.allclose(out3m, ref3m, rtol=1e-5, atol=1e-5), (out3m, ref3m)

    out3s = jax.block_until_ready(unbiased_cross_entropy(
        inputs, targets, old_cl=old_cl, mask=msk, reduction="sum",
        ignore_index=ignore_index, pixel_tile=1024))
    ref3s = _reference(inputs, targets, old_cl=old_cl, mask=msk, reduction="sum",
                       ignore_index=ignore_index)
    assert jnp.allclose(out3s, ref3s, rtol=1e-5, atol=1e-3), (out3s, ref3s)

    print("KERNEL_OK")
</pallas_src>

<mosaic_0001>
module attributes {stable_mosaic.version = 11 : i64} {
  func.func @_unbiased_ce_kernel(%arg0: i32, %arg1: i32, %arg2: i32, %arg3: memref<1x4x2x128xf32, #tpu.memory_space<vmem>>, %arg4: memref<1x1x2x128xi32, #tpu.memory_space<vmem>>, %arg5: memref<1x1x1x128xf32, #tpu.memory_space<vmem>>, %arg6: memref<1x1x1x128xi32, #tpu.memory_space<vmem>>) attributes {dimension_semantics = [#tpu.dimension_semantics<parallel>, #tpu.dimension_semantics<parallel>, #tpu.dimension_semantics<arbitrary>], iteration_bounds = array<i64: 2, 1, 1>, scalar_prefetch = 0 : i64, scratch_operands = 0 : i64, tpu.core_type = #tpu.core_type<tc>, window_params = [{transform_indices = @transform_0, window_bounds = array<i64: 1, 4, 2, 128>}, {transform_indices = @transform_1, window_bounds = array<i64: 1, 1, 2, 128>}, {transform_indices = @transform_2, window_bounds = array<i64: 1, 1, 1, 128>}, {transform_indices = @transform_3, window_bounds = array<i64: 1, 1, 1, 128>}]} {
    %c0_i32 = arith.constant 0 : i32
    %0 = arith.cmpi eq, %arg2, %c0_i32 : i32
    %1 = arith.extui %0 : i1 to i32
    %c0_i32_0 = arith.constant 0 : i32
    %2 = arith.cmpi ne, %1, %c0_i32_0 : i32
    scf.if %2 {
      %cst_55 = arith.constant 0.000000e+00 : f32
      %82 = vector.broadcast %cst_55 : f32 to vector<1x128xf32>
      %c0_56 = arith.constant 0 : index
      %c0_57 = arith.constant 0 : index
      %c0_58 = arith.constant 0 : index
      %c0_59 = arith.constant 0 : index
      %83 = vector.load %arg5[%c0_56, %c0_57, %c0_58, %c0_59] : memref<1x1x1x128xf32, #tpu.memory_space<vmem>>, vector<1x1x1x128xf32>
      %84 = vector.shape_cast %83 : vector<1x1x1x128xf32> to vector<1x128xf32>
      %85 = vector.shape_cast %82 : vector<1x128xf32> to vector<1x1x1x128xf32>
      tpu.vector_store %arg5[%c0_56, %c0_57, %c0_58, %c0_59], %85 {strides = array<i32>} : memref<1x1x1x128xf32, #tpu.memory_space<vmem>>, vector<1x1x1x128xf32>,
      %c0_i32_60 = arith.constant 0 : i32
      %86 = vector.broadcast %c0_i32_60 : i32 to vector<1x128xi32>
      %c0_61 = arith.constant 0 : index
      %c0_62 = arith.constant 0 : index
      %c0_63 = arith.constant 0 : index
      %c0_64 = arith.constant 0 : index
      %87 = vector.load %arg6[%c0_61, %c0_62, %c0_63, %c0_64] : memref<1x1x1x128xi32, #tpu.memory_space<vmem>>, vector<1x1x1x128xi32>
      %88 = vector.shape_cast %87 : vector<1x1x1x128xi32> to vector<1x128xi32>
      %89 = vector.shape_cast %86 : vector<1x128xi32> to vector<1x1x1x128xi32>
      tpu.vector_store %arg6[%c0_61, %c0_62, %c0_63, %c0_64], %89 {strides = array<i32>} : memref<1x1x1x128xi32, #tpu.memory_space<vmem>>, vector<1x1x1x128xi32>,
    } else {
    }
    %c0 = arith.constant 0 : index
    %c0_1 = arith.constant 0 : index
    %c0_2 = arith.constant 0 : index
    %c0_3 = arith.constant 0 : index
    %3 = vector.load %arg4[%c0, %c0_1, %c0_2, %c0_3] : memref<1x1x2x128xi32, #tpu.memory_space<vmem>>, vector<1x1x2x128xi32>
    %4 = vector.shape_cast %3 : vector<1x1x2x128xi32> to vector<2x128xi32>
    %c255_i32 = arith.constant 255 : i32
    %5 = vector.broadcast %c255_i32 : i32 to vector<2x128xi32>
    %6 = arith.cmpi ne, %4, %5 : vector<2x128xi32>
    %c0_4 = arith.constant 0 : index
    %c0_5 = arith.constant 0 : index
    %c0_6 = arith.constant 0 : index
    %c0_7 = arith.constant 0 : index
    %7 = vector.load %arg3[%c0_4, %c0_5, %c0_6, %c0_7] : memref<1x4x2x128xf32, #tpu.memory_space<vmem>>, vector<1x1x2x128xf32>
    %8 = vector.shape_cast %7 : vector<1x1x2x128xf32> to vector<2x128xf32>
    %c0_8 = arith.constant 0 : index
    %c1 = arith.constant 1 : index
    %c0_9 = arith.constant 0 : index
    %c0_10 = arith.constant 0 : index
    %9 = vector.load %arg3[%c0_8, %c1, %c0_9, %c0_10] : memref<1x4x2x128xf32, #tpu.memory_space<vmem>>, vector<1x1x2x128xf32>
    %10 = vector.shape_cast %9 : vector<1x1x2x128xf32> to vector<2x128xf32>
    %11 = arith.maximumf %8, %10 : vector<2x128xf32>
    %c0_11 = arith.constant 0 : index
    %c2 = arith.constant 2 : index
    %c0_12 = arith.constant 0 : index
    %c0_13 = arith.constant 0 : index
    %12 = vector.load %arg3[%c0_11, %c2, %c0_12, %c0_13] : memref<1x4x2x128xf32, #tpu.memory_space<vmem>>, vector<1x1x2x128xf32>
    %13 = vector.shape_cast %12 : vector<1x1x2x128xf32> to vector<2x128xf32>
    %c0_14 = arith.constant 0 : index
    %c3 = arith.constant 3 : index
    %c0_15 = arith.constant 0 : index
    %c0_16 = arith.constant 0 : index
    %14 = vector.load %arg3[%c0_14, %c3, %c0_15, %c0_16] : memref<1x4x2x128xf32, #tpu.memory_space<vmem>>, vector<1x1x2x128xf32>
    %15 = vector.shape_cast %14 : vector<1x1x2x128xf32> to vector<2x128xf32>
    %16 = arith.maximumf %13, %15 : vector<2x128xf32>
    %cst = arith.constant 0.000000e+00 : f32
    %17 = vector.broadcast %cst : f32 to vector<2x128xf32>
    %cst_17 = arith.constant 0.000000e+00 : f32
    %18 = vector.broadcast %cst_17 : f32 to vector<2x128xf32>
    %cst_18 = arith.constant 0.000000e+00 : f32
    %19 = vector.broadcast %cst_18 : f32 to vector<2x128xf32>
    %c0_19 = arith.constant 0 : index
    %c0_20 = arith.constant 0 : index
    %c0_21 = arith.constant 0 : index
    %c0_22 = arith.constant 0 : index
    %20 = vector.load %arg3[%c0_19, %c0_20, %c0_21, %c0_22] : memref<1x4x2x128xf32, #tpu.memory_space<vmem>>, vector<1x1x2x128xf32>
    %21 = vector.shape_cast %20 : vector<1x1x2x128xf32> to vector<2x128xf32>
    %22 = arith.subf %21, %11 : vector<2x128xf32>
    %23 = math.exp %22 : vector<2x128xf32>
    %24 = arith.addf %17, %23 : vector<2x128xf32>
    %c0_23 = arith.constant 0 : index
    %c1_24 = arith.constant 1 : index
    %c0_25 = arith.constant 0 : index
    %c0_26 = arith.constant 0 : index
    %25 = vector.load %arg3[%c0_23, %c1_24, %c0_25, %c0_26] : memref<1x4x2x128xf32, #tpu.memory_space<vmem>>, vector<1x1x2x128xf32>
    %26 = vector.shape_cast %25 : vector<1x1x2x128xf32> to vector<2x128xf32>
    %27 = arith.subf %26, %11 : vector<2x128xf32>
    %28 = math.exp %27 : vector<2x128xf32>
    %29 = arith.addf %24, %28 : vector<2x128xf32>
    %c0_27 = arith.constant 0 : index
    %c2_28 = arith.constant 2 : index
    %c0_29 = arith.constant 0 : index
    %c0_30 = arith.constant 0 : index
    %30 = vector.load %arg3[%c0_27, %c2_28, %c0_29, %c0_30] : memref<1x4x2x128xf32, #tpu.memory_space<vmem>>, vector<1x1x2x128xf32>
    %31 = vector.shape_cast %30 : vector<1x1x2x128xf32> to vector<2x128xf32>
    %32 = arith.subf %31, %16 : vector<2x128xf32>
    %33 = math.exp %32 : vector<2x128xf32>
    %34 = arith.addf %18, %33 : vector<2x128xf32>
    %c2_i32 = arith.constant 2 : i32
    %35 = vector.broadcast %c2_i32 : i32 to vector<2x128xi32>
    %36 = arith.cmpi eq, %4, %35 : vector<2x128xi32>
    %37 = arith.select %36, %31, %19 : vector<2x128xi1>, vector<2x128xf32>
    %c0_31 = arith.constant 0 : index
    %c3_32 = arith.constant 3 : index
    %c0_33 = arith.constant 0 : index
    %c0_34 = arith.constant 0 : index
    %38 = vector.load %arg3[%c0_31, %c3_32, %c0_33, %c0_34] : memref<1x4x2x128xf32, #tpu.memory_space<vmem>>, vector<1x1x2x128xf32>
    %39 = vector.shape_cast %38 : vector<1x1x2x128xf32> to vector<2x128xf32>
    %40 = arith.subf %39, %16 : vector<2x128xf32>
    %41 = math.exp %40 : vector<2x128xf32>
    %42 = arith.addf %34, %41 : vector<2x128xf32>
    %c3_i32 = arith.constant 3 : i32
    %43 = vector.broadcast %c3_i32 : i32 to vector<2x128xi32>
    %44 = arith.cmpi eq, %4, %43 : vector<2x128xi32>
    %45 = arith.select %44, %39, %37 : vector<2x128xi1>, vector<2x128xf32>
    %46 = arith.maximumf %11, %16 : vector<2x128xf32>
    %47 = arith.subf %11, %46 : vector<2x128xf32>
    %48 = math.exp %47 : vector<2x128xf32>
    %49 = arith.mulf %29, %48 : vector<2x128xf32>
    %50 = arith.subf %16, %46 : vector<2x128xf32>
    %51 = math.exp %50 : vector<2x128xf32>
    %52 = arith.mulf %42, %51 : vector<2x128xf32>
    %53 = arith.addf %49, %52 : vector<2x128xf32>
    %54 = math.log %53 : vector<2x128xf32>
    %55 = arith.addf %46, %54 : vector<2x128xf32>
    %56 = math.log %29 : vector<2x128xf32>
    %57 = arith.addf %11, %56 : vector<2x128xf32>
    %c2_i32_35 = arith.constant 2 : i32
    %58 = vector.broadcast %c2_i32_35 : i32 to vector<2x128xi32>
    %59 = arith.cmpi slt, %4, %58 : vector<2x128xi32>
    %60 = arith.subf %55, %57 : vector<2x128xf32>
    %61 = arith.subf %55, %45 : vector<2x128xf32>
    %62 = arith.select %59, %60, %61 : vector<2x128xi1>, vector<2x128xf32>
    %cst_36 = arith.constant 0.000000e+00 : f32
    %63 = vector.broadcast %cst_36 : f32 to vector<2x128xf32>
    %64 = arith.select %6, %62, %63 : vector<2x128xi1>, vector<2x128xf32>
    %c0_37 = arith.constant 0 : index
    %c0_38 = arith.constant 0 : index
    %c0_39 = arith.constant 0 : index
    %c0_40 = arith.constant 0 : index
    %65 = vector.load %arg5[%c0_37, %c0_38, %c0_39, %c0_40] : memref<1x1x1x128xf32, #tpu.memory_space<vmem>>, vector<1x1x1x128xf32>
    %66 = vector.shape_cast %65 : vector<1x1x1x128xf32> to vector<1x128xf32>
    %cst_41 = arith.constant dense<0.000000e+00> : vector<128xf32>
    %67 = vector.multi_reduction <add>, %64, %cst_41 [0] : vector<2x128xf32> to vector<128xf32>
    %68 = vector.shape_cast %67 : vector<128xf32> to vector<1x128xf32>
    %69 = arith.addf %66, %68 : vector<1x128xf32>
    %c0_42 = arith.constant 0 : index
    %c0_43 = arith.constant 0 : index
    %c0_44 = arith.constant 0 : index
    %c0_45 = arith.constant 0 : index
    %70 = vector.load %arg5[%c0_42, %c0_43, %c0_44, %c0_45] : memref<1x1x1x128xf32, #tpu.memory_space<vmem>>, vector<1x1x1x128xf32>
    %71 = vector.shape_cast %70 : vector<1x1x1x128xf32> to vector<1x128xf32>
    %72 = vector.shape_cast %69 : vector<1x128xf32> to vector<1x1x1x128xf32>
    tpu.vector_store %arg5[%c0_42, %c0_43, %c0_44, %c0_45], %72 {strides = array<i32>} : memref<1x1x1x128xf32, #tpu.memory_space<vmem>>, vector<1x1x1x128xf32>,
    %c0_46 = arith.constant 0 : index
    %c0_47 = arith.constant 0 : index
    %c0_48 = arith.constant 0 : index
    %c0_49 = arith.constant 0 : index
    %73 = vector.load %arg6[%c0_46, %c0_47, %c0_48, %c0_49] : memref<1x1x1x128xi32, #tpu.memory_space<vmem>>, vector<1x1x1x128xi32>
    %74 = vector.shape_cast %73 : vector<1x1x1x128xi32> to vector<1x128xi32>
    %75 = arith.extui %6 : vector<2x128xi1> to vector<2x128xi32>
    %cst_50 = arith.constant dense<0> : vector<128xi32>
    %76 = vector.multi_reduction <add>, %75, %cst_50 [0] : vector<2x128xi32> to vector<128xi32>
    %77 = vector.shape_cast %76 : vector<128xi32> to vector<1x128xi32>
    %78 = arith.addi %74, %77 : vector<1x128xi32>
    %c0_51 = arith.constant 0 : index
    %c0_52 = arith.constant 0 : index
    %c0_53 = arith.constant 0 : index
    %c0_54 = arith.constant 0 : index
    %79 = vector.load %arg6[%c0_51, %c0_52, %c0_53, %c0_54] : memref<1x1x1x128xi32, #tpu.memory_space<vmem>>, vector<1x1x1x128xi32>
    %80 = vector.shape_cast %79 : vector<1x1x1x128xi32> to vector<1x128xi32>
    %81 = vector.shape_cast %78 : vector<1x128xi32> to vector<1x1x1x128xi32>
    tpu.vector_store %arg6[%c0_51, %c0_52, %c0_53, %c0_54], %81 {strides = array<i32>} : memref<1x1x1x128xi32, #tpu.memory_space<vmem>>, vector<1x1x1x128xi32>,
    return
  }
  func.func @transform_0(%arg0: i32, %arg1: i32, %arg2: i32) -> (i32, i32, i32, i32) {
    %c1_i32 = arith.constant 1 : i32
    %0 = arith.muli %arg1, %c1_i32 : i32
    %1 = arith.addi %0, %arg2 : i32
    %c0_i32 = arith.constant 0 : i32
    %2 = arith.minsi %1, %c0_i32 : i32
    %c0_i32_0 = arith.constant 0 : i32
    %c0_i32_1 = arith.constant 0 : i32
    %c0_i32_2 = arith.constant 0 : i32
    return %arg0, %c0_i32_0, %2, %c0_i32_1 : i32, i32, i32, i32
  }
  func.func @transform_1(%arg0: i32, %arg1: i32, %arg2: i32) -> (i32, i32, i32, i32) {
    %c1_i32 = arith.constant 1 : i32
    %0 = arith.muli %arg1, %c1_i32 : i32
    %1 = arith.addi %0, %arg2 : i32
    %c0_i32 = arith.constant 0 : i32
    %c0_i32_0 = arith.constant 0 : i32
    %c0_i32_1 = arith.constant 0 : i32
    return %arg0, %c0_i32, %1, %c0_i32_0 : i32, i32, i32, i32
  }
  func.func @transform_2(%arg0: i32, %arg1: i32, %arg2: i32) -> (i32, i32, i32, i32) {
    %c0_i32 = arith.constant 0 : i32
    %c0_i32_0 = arith.constant 0 : i32
    %c0_i32_1 = arith.constant 0 : i32
    return %arg0, %arg1, %c0_i32, %c0_i32_0 : i32, i32, i32, i32
  }
  func.func @transform_3(%arg0: i32, %arg1: i32, %arg2: i32) -> (i32, i32, i32, i32) {
    %c0_i32 = arith.constant 0 : i32
    %c0_i32_0 = arith.constant 0 : i32
    %c0_i32_1 = arith.constant 0 : i32
    return %arg0, %arg1, %c0_i32, %c0_i32_0 : i32, i32, i32, i32
  }
}

</mosaic_0001>

<llo_original>
// kernel: tpu_custom_call.1
$region0: #{tpu_custom_call.1}
  #allocation0 [shape = 'u32[]', space=smem, size = 0x4, offset = 0x4, fixed_abs, tag = 'smem constant byte address 0x4 - core index']
  #allocation1 [shape = 'u32[144,128]{1,0:T(1,128)}', space=vmem, size = 0x12000, scoped, tag = 'internal scratch']
  %s0 = inlined_call_operand.hbm [shape: f32[2,4,2,128], index: 0, kind: input, shape index: {}]
  %s1 = inlined_call_operand.hbm [shape: s32[2,1,2,128], index: 1, kind: input, shape index: {}]
  %s2 = inlined_call_operand.hbm [shape: f32[2,1,1,128], index: 2, kind: output, shape index: {0}]
  %s3 = inlined_call_operand.hbm [shape: s32[2,1,1,128], index: 3, kind: output, shape index: {1}]
  %4 = xla_tuple %s2, %s3
  %s5 = sld [smem:[#allocation0]]
  $region61: #{tpu_custom_call.1} parent=0
    _
  %s7 = ssub.s32 1, %s5
  %s8 = scalar_select 0, %s7, %s5
  $region1: #{tpu_custom_call.1} parent=0
    #allocation2 [shape = 'u8[8192]{0}', space=vmem, size = 0x2000, scoped, tag = 'input window, operand 0']
    #allocation3 [shape = 's32[2]{0}', space=sflag, size = 0x8, scoped, tag = 'scoped memory for tpu_custom_call.1']
    #allocation4 [shape = 's32[2]{0}', space=sflag, size = 0x8, scoped, tag = 'scoped memory for tpu_custom_call.1']
    #allocation5 [shape = 'u8[2048]{0}', space=vmem, size = 0x800, scoped, tag = 'input window, operand 1']
    #allocation6 [shape = 's32[2]{0}', space=sflag, size = 0x8, scoped, tag = 'scoped memory for tpu_custom_call.1']
    #allocation7 [shape = 'u8[1024]{0}', space=vmem, size = 0x400, scoped, tag = 'output window, operand 0']
    #allocation8 [shape = 'u8[1024]{0}', space=vmem, size = 0x400, scoped, tag = 'output window, operand 1']
    #allocation9 [shape = 's32[2]{0}', space=sflag, size = 0x8, scoped, tag = 'scoped memory for tpu_custom_call.1']
    %9 = vsyncpa [#allocation3], 0
    %s10 = scalar_lea.sflag [#allocation3], 1
    %11 = vsyncpa %s10, 0
    %12 = vsyncpa [#allocation6], 0
    %s13 = scalar_lea.sflag [#allocation6], 1
    %14 = vsyncpa %s13, 0
    %15 = vsyncpa [#allocation4], 0
    %s16 = scalar_lea.sflag [#allocation4], 1
    %17 = vsyncpa %s16, 0
    %18 = vsyncpa [#allocation9], 0
    %s19 = scalar_lea.sflag [#allocation9], 1
    %20 = vsyncpa %s19, 0
    loop: start=0, step=1, limit=4
    $region2: #{tpu_custom_call.1} parent=1 // loop_pre_header
      _
    $region3: #{tpu_custom_call.1} parent=1 // loop_header
      %s22 = sphi 0, %s26
      %p23 = scmp.ge.s32.totalorder %s22, 4
      %s29 = sphi 0, %s48
      %s30 = sphi 0, %s44
      %s31 = sphi 0, %s40
      %s32 = sphi 0, %s29
      %s33 = sphi 0, %s30
      %s34 = sphi 0, %s31
      %s35 = sphi 0, %s32
      %s36 = sphi 0, %s33
      %s37 = sphi 0, %s34
      %s59 = sphi 0, %s61
      %s62 = sphi 0, %s59
      %s63 = sphi 0, %s62
      %s79 = sphi 0, %s63
      %s89 = sphi 0, %s91
      %s92 = sphi 0, %s89
      %s93 = sphi 0, %s92
      %s109 = sphi 0, %s93
      %s117 = sphi 0, %s119
      %s120 = sphi 0, %s117
      %s121 = sphi 0, %s120
      %s137 = sphi 0, %s121
      %s145 = sphi 0, %s147
      %s148 = sphi 0, %s145
      %s149 = sphi 0, %s148
      %s165 = sphi 0, %s149
    $region4: #{tpu_custom_call.1} parent=1 // loop_header_branch
      %25 = sbr.rel (%p23) target = $region8
    $region5: #{tpu_custom_call.1} parent=1 // loop_body
      %s27 = ssub.s32 %s22, 1
      %s28 = ssub.s32 %s22, 2
      %s38 = sadd.s32 1, %s31
      %p39 = scmp.ge.s32.totalorder %s38, 1
      %s40 = scalar_select %p39, 0, %s38
      %s41 = sadd.s32 1, %s30
      %s42 = scalar_select %p39, %s41, %s30
      %p43 = scmp.ge.s32.totalorder %s42, 1
      %s44 = scalar_select %p43, 0, %s42
      %s45 = sadd.s32 1, %s29
      %s46 = scalar_select %p43, %s45, %s29
      %p47 = scmp.ge.s32.totalorder %s46, 2
      %s48 = scalar_select %p47, 0, %s46
      %s49 = sadd.s32 %s30, %s31
      %p50 = scmp.lt.s32.totalorder %s49, 0
      %s51 = scalar_select %p50, %s49, 0
      %s52 = sadd.s32 %s44, %s40
      %p53 = scmp.lt.s32.totalorder %s52, 0
      %s54 = scalar_select %p53, %s52, 0
      %s55 = ssub.s32 %s29, %s48
      %s56 = ssub.s32 %s51, %s54
      %s57 = sor.u32 %s55, %s56
      %p58 = scmp.eq.s32.totalorder %s57, 0
      %s60 = sadd.s32 %s59, 1
      %s61 = scalar_select %p58, %s59, %s60
      %p64 = pneg %p58
      %p65 = scmp.eq.s32.totalorder %s22, 1
      %p66 = por %p64, %p65
      %p67 = scmp.ne.s32.totalorder %s59, %s62
      %p68 = scmp.eq.s32.totalorder %s22, 0
      %p69 = por %p67, %p68
      %p70 = scmp.ne.s32.totalorder %s59, %s62
      %p71 = scmp.eq.s32.totalorder %s27, 1
      %p72 = por %p70, %p71
      %p73 = scmp.ne.s32.totalorder %s62, %s63
      %p74 = scmp.eq.s32.totalorder %s27, 0
      %p75 = por %p73, %p74
      %p76 = scmp.ne.s32.totalorder %s62, %s63
      %p77 = scmp.eq.s32.totalorder %s28, 1
      %p78 = por %p76, %p77
      %p80 = scmp.ne.s32.totalorder %s63, %s79
      %p81 = scmp.eq.s32.totalorder %s28, 0
      %p82 = por %p80, %p81
      %s83 = sadd.s32 %s30, %s31
      %s84 = sadd.s32 %s44, %s40
      %s85 = ssub.s32 %s29, %s48
      %s86 = ssub.s32 %s83, %s84
      %s87 = sor.u32 %s85, %s86
      %p88 = scmp.eq.s32.totalorder %s87, 0
      %s90 = sadd.s32 %s89, 1
      %s91 = scalar_select %p88, %s89, %s90
      %p94 = pneg %p88
      %p95 = scmp.eq.s32.totalorder %s22, 1
      %p96 = por %p94, %p95
      %p97 = scmp.ne.s32.totalorder %s89, %s92
      %p98 = scmp.eq.s32.totalorder %s22, 0
      %p99 = por %p97, %p98
      %p100 = scmp.ne.s32.totalorder %s89, %s92
      %p101 = scmp.eq.s32.totalorder %s27, 1
      %p102 = por %p100, %p101
      %p103 = scmp.ne.s32.totalorder %s92, %s93
      %p104 = scmp.eq.s32.totalorder %s27, 0
      %p105 = por %p103, %p104
      %p106 = scmp.ne.s32.totalorder %s92, %s93
      %p107 = scmp.eq.s32.totalorder %s28, 1
      %p108 = por %p106, %p107
      %p110 = scmp.ne.s32.totalorder %s93, %s109
      %p111 = scmp.eq.s32.totalorder %s28, 0
      %p112 = por %p110, %p111
      %s113 = ssub.s32 %s29, %s48
      %s114 = ssub.s32 %s30, %s44
      %s115 = sor.u32 %s113, %s114
      %p116 = scmp.eq.s32.totalorder %s115, 0
      %s118 = sadd.s32 %s117, 1
      %s119 = scalar_select %p116, %s117, %s118
      %p122 = pneg %p116
      %p123 = scmp.eq.s32.totalorder %s22, 1
      %p124 = por %p122, %p123
      %p125 = scmp.ne.s32.totalorder %s117, %s120
      %p126 = scmp.eq.s32.totalorder %s22, 0
      %p127 = por %p125, %p126
      %p128 = scmp.ne.s32.totalorder %s117, %s120
      %p129 = scmp.eq.s32.totalorder %s27, 1
      %p130 = por %p128, %p129
      %p131 = scmp.ne.s32.totalorder %s120, %s121
      %p132 = scmp.eq.s32.totalorder %s27, 0
      %p133 = por %p131, %p132
      %p134 = scmp.ne.s32.totalorder %s120, %s121
      %p135 = scmp.eq.s32.totalorder %s28, 1
      %p136 = por %p134, %p135
      %p138 = scmp.ne.s32.totalorder %s121, %s137
      %p139 = scmp.eq.s32.totalorder %s28, 0
      %p140 = por %p138, %p139
      %s141 = ssub.s32 %s29, %s48
      %s142 = ssub.s32 %s30, %s44
      %s143 = sor.u32 %s141, %s142
      %p144 = scmp.eq.s32.totalorder %s143, 0
      %s146 = sadd.s32 %s145, 1
      %s147 = scalar_select %p144, %s145, %s146
      %p150 = pneg %p144
      %p151 = scmp.eq.s32.totalorder %s22, 1
      %p152 = por %p150, %p151
      %p153 = scmp.ne.s32.totalorder %s145, %s148
      %p154 = scmp.eq.s32.totalorder %s22, 0
      %p155 = por %p153, %p154
      %p156 = scmp.ne.s32.totalorder %s145, %s148
      %p157 = scmp.eq.s32.totalorder %s27, 1
      %p158 = por %p156, %p157
      %p159 = scmp.ne.s32.totalorder %s148, %s149
      %p160 = scmp.eq.s32.totalorder %s27, 0
      %p161 = por %p159, %p160
      %p162 = scmp.ne.s32.totalorder %s148, %s149
      %p163 = scmp.eq.s32.totalorder %s28, 1
      %p164 = por %p162, %p163
      %p166 = scmp.ne.s32.totalorder %s149, %s165
      %p167 = scmp.eq.s32.totalorder %s28, 0
      %p168 = por %p166, %p167
      %p169 = scmp.le.s32.totalorder 1, %s22
      %p170 = scmp.lt.s32.totalorder %s22, 3
      %p171 = pnand %p169, %p170
      %p172 = pneg %p171
      // Predicated region
      $region9: #{tpu_custom_call.1} parent=5 // pred_check
        _
      $region10: #{tpu_custom_call.1} parent=5 // pred_check_branch
        %174 = sbr.rel (%p171) target = $region12
      $region11: #{tpu_custom_call.1} parent=5 // pred_region
        %s175 = ssub.s32 %s22, 1
      $region12: #{tpu_custom_call.1} parent=5 // pred_fallthru
        _
      %p176 = scmp.lt.s32.totalorder %s22, 2
      // Predicated region
      $region13: #{tpu_custom_call.1} parent=5 // pred_check
        %p177 = pneg %p176
      $region14: #{tpu_custom_call.1} parent=5 // pred_check_branch
        %179 = sbr.rel (%p177) target = $region16
      $region15: #{tpu_custom_call.1} parent=5 // pred_region
        // Predicated region
        $region17: #{tpu_custom_call.1} parent=15 // pred_check
          %p180 = pneg %p69
        $region18: #{tpu_custom_call.1} parent=15 // pred_check_branch
          %182 = sbr.rel (%p180) target = $region20
        $region19: #{tpu_custom_call.1} parent=15 // pred_region
          %s183 = sand.u32 %s59, 1
          %s184 = scalar_lea.sflag [#allocation3], %s183
          %s185 = sand.u32 %s59, 1
          %s186 = smul.addr %s185, 8
          %s187 = scalar_lea.vmem [#allocation2], %s186
          %s188 = sadd.s32 %s30, %s31
          %p189 = scmp.lt.s32.totalorder %s188, 0
          %s190 = scalar_select %p189, %s188, 0
          %s192 = ssub.s32 128, 128
          %193 = vsyncadd %s184, %s192
          %s194 = smul.addr %s29, 4
          %s195 = sadd.s32 %s190, %s194
          %s196 = smul.addr %s195, 32
          %s197 = scalar_lea.hbm %s0, %s196
          %s198 = sshll.u32 %s187, 4
          %s199 = int_to_ptr.vmem [resolvable:$true] %s198
          %204 = dma.hbm_to_vmem [thread:$0]  %s197, 128, %s199, %s184, 32, 32, 2
        $region20: #{tpu_custom_call.1} parent=15 // pred_fallthru
          _
        // Predicated region
        $region21: #{tpu_custom_call.1} parent=15 // pred_check
          %p205 = pneg %p99
        $region22: #{tpu_custom_call.1} parent=15 // pred_check_branch
          %207 = sbr.rel (%p205) target = $region24
        $region23: #{tpu_custom_call.1} parent=15 // pred_region
          %s208 = sand.u32 %s89, 1
          %s209 = scalar_lea.sflag [#allocation6], %s208
          %s210 = sand.u32 %s89, 1
          %s211 = smul.addr %s210, 2
          %s212 = scalar_lea.vmem [#allocation5], %s211
          %s213 = sadd.s32 %s30, %s31
          %s215 = ssub.s32 32, 32
          %216 = vsyncadd %s209, %s215
          %s217 = sadd.s32 %s213, %s29
          %s218 = smul.addr %s217, 32
          %s219 = scalar_lea.hbm %s1, %s218
          %s221 = sshll.u32 %s212, 4
          %s222 = int_to_ptr.vmem [resolvable:$true] %s221
          %224 = dma.hbm_to_vmem [thread:$0]  %s219, 32, %s222, %s209
        $region24: #{tpu_custom_call.1} parent=15 // pred_fallthru
          _
      $region16: #{tpu_custom_call.1} parent=5 // pred_fallthru
        _
      %p225 = scmp.le.s32.totalorder 1, %s22
      %p226 = scmp.lt.s32.totalorder %s22, 3
      %p227 = pnand %p225, %p226
      %p228 = pneg %p227
      // Predicated region
      $region25: #{tpu_custom_call.1} parent=5 // pred_check
        _
      $region26: #{tpu_custom_call.1} parent=5 // pred_check_branch
        %230 = sbr.rel (%p227) target = $region28
      $region27: #{tpu_custom_call.1} parent=5 // pred_region
        %s231 = ssub.s32 %s22, 1
        %s232 = sand.u32 %s62, 1
        %s233 = scalar_lea.sflag [#allocation3], %s232
        %s234 = sand.u32 %s62, 1
        %s235 = smul.addr %s234, 8
        %s236 = scalar_lea.vmem [#allocation2], %s235
        // Predicated region
        $region29: #{tpu_custom_call.1} parent=27 // pred_check
          %p237 = pneg %p75
        $region30: #{tpu_custom_call.1} parent=27 // pred_check_branch
          %239 = sbr.rel (%p237) target = $region32
        $region31: #{tpu_custom_call.1} parent=27 // pred_region
          %240 = dma.done %s233, 128
        $region32: #{tpu_custom_call.1} parent=27 // pred_fallthru
          _
        %s241 = sand.u32 %s92, 1
        %s242 = scalar_lea.sflag [#allocation6], %s241
        %s243 = sand.u32 %s92, 1
        %s244 = smul.addr %s243, 2
        %s245 = scalar_lea.vmem [#allocation5], %s244
        // Predicated region
        $region33: #{tpu_custom_call.1} parent=27 // pred_check
          %p246 = pneg %p105
        $region34: #{tpu_custom_call.1} parent=27 // pred_check_branch
          %248 = sbr.rel (%p246) target = $region36
        $region35: #{tpu_custom_call.1} parent=27 // pred_region
          %249 = dma.done %s242, 32
        $region36: #{tpu_custom_call.1} parent=27 // pred_fallthru
          _
        %s250 = sand.u32 %s62, 1
        %s251 = scalar_lea.sflag [#allocation3], %s250
        %s252 = sand.u32 %s62, 1
        %s253 = smul.addr %s252, 8
        %s254 = scalar_lea.vmem [#allocation2], %s253
        %p255 = pneg %p75
        %p256 = pneg %p72
        %s257 = sand.u32 %s92, 1
        %s258 = scalar_lea.sflag [#allocation6], %s257
        %s259 = sand.u32 %s92, 1
        %s260 = smul.addr %s259, 2
        %s261 = scalar_lea.vmem [#allocation5], %s260
        %p262 = pneg %p105
        %p263 = pneg %p102
        %p264 = pneg %p133
        %p265 = pneg %p130
        %s266 = sand.u32 %s120, 1
        %s267 = scalar_lea.sflag [#allocation4], %s266
        %s268 = sand.u32 %s120, 1
        %s269 = scalar_lea.vmem [#allocation7], %s268
        %p270 = pneg %p161
        %p271 = pneg %p158
        %s272 = sand.u32 %s148, 1
        %s273 = scalar_lea.sflag [#allocation9], %s272
        %s274 = sand.u32 %s148, 1
        %s275 = scalar_lea.vmem [#allocation8], %s274
        %s276 = sadd.s32 %s33, %s34
        %p277 = scmp.lt.s32.totalorder %s276, 0
        %s278 = scalar_select %p277, %s276, 0
        %s279 = sadd.s32 %s33, %s34
        %p280 = scmp.eq.s32.totalorder %s34, 0
        // Predicated region
        $region37: #{tpu_custom_call.1} parent=27 // pred_check
          %p281 = pneg %p280
        $region38: #{tpu_custom_call.1} parent=27 // pred_check_branch
          %283 = sbr.rel (%p281) target = $region40
        $region39: #{tpu_custom_call.1} parent=27 // pred_region
          %284 = vst [vmem:[%s269] sm:$0x1] 0.0
          %285 = vst [vmem:[%s275] sm:$0x1] 0
        $region40: #{tpu_custom_call.1} parent=27 // pred_fallthru
          _
        %v286 = vld [vmem:[%s245] sm:$0x3]
        %vm287 = vcmp.ne.s32.totalorder %v286, 255
        %v288 = vld [vmem:[%s236] sm:$0x3]
        %s289 = scalar_lea.vmem %s236, 2 [#allocation2]
        %v290 = vld [vmem:[%s289] sm:$0x3]
        %v291 = vmax.f32 %v288, %v290
        %s292 = scalar_lea.vmem %s236, 4 [#allocation2]
        %v293 = vld [vmem:[%s292] sm:$0x3]
        %s294 = scalar_lea.vmem %s236, 6 [#allocation2]
        %v295 = vld [vmem:[%s294] sm:$0x3]
        %v296 = vmax.f32 %v293, %v295
        %v297 = vsub.f32 %v288, %v291
        %v298 = vmul.f32 %v297, 1.442695
        %v299 = vpow.pop %v298
        %v300 = vadd.f32 %v299, 0.0
        %v301 = vsub.f32 %v290, %v291
        %v302 = vmul.f32 %v301, 1.442695
        %v303 = vpow.pop %v302
        %v304 = vadd.f32 %v300, %v303
        %v305 = vsub.f32 %v293, %v296
        %v306 = vmul.f32 %v305, 1.442695
        %v307 = vpow.pop %v306
        %v308 = vadd.f32 %v307, 0.0
        %vm309 = vcmp.eq.s32.totalorder %v286, 2
        %v310 = vsel %vm309, %v293, 0.0
        %v311 = vsub.f32 %v295, %v296
        %v312 = vmul.f32 %v311, 1.442695
        %v313 = vpow.pop %v312
        %v314 = vadd.f32 %v308, %v313
        %vm315 = vcmp.eq.s32.totalorder %v286, 3
        %v316 = vsel %vm315, %v295, %v310
        %v317 = vmax.f32 %v291, %v296
        %v318 = vsub.f32 %v291, %v317
        %v319 = vmul.f32 %v318, 1.442695
        %v320 = vpow.pop %v319
        %v321 = vmul.f32 %v304, %v320
        %v322 = vsub.f32 %v296, %v317
        %v323 = vmul.f32 %v322, 1.442695
        %v324 = vpow.pop %v323
        %v325 = vmul.f32 %v314, %v324
        %v326 = vadd.f32 %v321, %v325
        %v327 = vlog2.pop %v326
        %v328 = vmul.f32 %v327, 0.6931472
        %v329 = vadd.f32 %v317, %v328
        %v330 = vlog2.pop %v304
        %v331 = vmul.f32 %v330, 0.6931472
        %v332 = vadd.f32 %v291, %v331
        %vm333 = vcmp.lt.s32.totalorder %v286, 2
        %v334 = vsub.f32 %v329, %v332
        %v335 = vsub.f32 %v329, %v316
        %v336 = vsel %vm333, %v334, %v335
        %v337 = vsel %vm287, %v336, 0.0
        %v338 = vld [vmem:[%s269] sm:$0x1]
        %vm339 = vcmask 1041408
        %v340 = vsel %vm339, %v337, 0.0
        %v341 = vrot.slane %v340, 4
        %v342 = vadd.f32 %v340, %v341
        %v343 = vrot.slane %v342, 2
        %v344 = vadd.f32 %v342, %v343
        %v345 = vrot.slane %v344, 1
        %v346 = vadd.f32 %v344, %v345
        %v347 = vadd.f32 %v338, %v346
        %348 = vst [vmem:[%s269] sm:$0x1] %v347
        %v349 = vld [vmem:[%s275] sm:$0x1]
        %v350 = vsel %vm287, 1, 0
        %v351 = vsel %vm339, %v350, 0
        %v352 = vrot.slane %v351, 4
        %v353 = vadd.s32 %v351, %v352
        %v354 = vrot.slane %v353, 2
        %v355 = vadd.s32 %v353, %v354
        %v356 = vrot.slane %v355, 1
        %v357 = vadd.s32 %v355, %v356
        %v358 = vadd.s32 %v349, %v357
        %359 = vst [vmem:[%s275] sm:$0x1] %v358
        %s360 = sand.u32 %s120, 1
        %s361 = scalar_lea.sflag [#allocation4], %s360
        %s362 = sand.u32 %s120, 1
        %s363 = scalar_lea.vmem [#allocation7], %s362
        %s364 = sand.u32 %s148, 1
        %s365 = scalar_lea.sflag [#allocation9], %s364
        %s366 = sand.u32 %s148, 1
        %s367 = scalar_lea.vmem [#allocation8], %s366
        // Predicated region
        $region41: #{tpu_custom_call.1} parent=27 // pred_check
          %p368 = pneg %p130
        $region42: #{tpu_custom_call.1} parent=27 // pred_check_branch
          %370 = sbr.rel (%p368) target = $region44
        $region43: #{tpu_custom_call.1} parent=27 // pred_region
          %s372 = ssub.s32 16, 16
          %373 = vsyncadd %s361, %s372
          %s374 = sadd.s32 %s33, %s32
          %s375 = smul.addr %s374, 16
          %s376 = scalar_lea.hbm %s2, %s375
          %s378 = sshll.u32 %s363, 4
          %s379 = int_to_ptr.vmem [resolvable:$true] %s378
          %381 = dma.vmem_to_hbm [thread:$0]  %s379, 16, %s376, %s361
        $region44: #{tpu_custom_call.1} parent=27 // pred_fallthru
          _
        // Predicated region
        $region45: #{tpu_custom_call.1} parent=27 // pred_check
          %p382 = pneg %p158
        $region46: #{tpu_custom_call.1} parent=27 // pred_check_branch
          %384 = sbr.rel (%p382) target = $region48
        $region47: #{tpu_custom_call.1} parent=27 // pred_region
          %s386 = ssub.s32 16, 16
          %387 = vsyncadd %s365, %s386
          %s388 = sadd.s32 %s33, %s32
          %s389 = smul.addr %s388, 16
          %s390 = scalar_lea.hbm %s3, %s389
          %s392 = sshll.u32 %s367, 4
          %s393 = int_to_ptr.vmem [resolvable:$true] %s392
          %395 = dma.vmem_to_hbm [thread:$0]  %s393, 16, %s390, %s365
        $region48: #{tpu_custom_call.1} parent=27 // pred_fallthru
          _
      $region28: #{tpu_custom_call.1} parent=5 // pred_fallthru
        _
      %p396 = scmp.le.s32.totalorder 2, %s22
      // Predicated region
      $region49: #{tpu_custom_call.1} parent=5 // pred_check
        %p397 = pneg %p396
      $region50: #{tpu_custom_call.1} parent=5 // pred_check_branch
        %399 = sbr.rel (%p397) target = $region52
      $region51: #{tpu_custom_call.1} parent=5 // pred_region
        %s400 = ssub.s32 %s22, 2
        // Predicated region
        $region53: #{tpu_custom_call.1} parent=51 // pred_check
          %p401 = pneg %p136
        $region54: #{tpu_custom_call.1} parent=51 // pred_check_branch
          %403 = sbr.rel (%p401) target = $region56
        $region55: #{tpu_custom_call.1} parent=51 // pred_region
          %s404 = sand.u32 %s121, 1
          %s405 = scalar_lea.sflag [#allocation4], %s404
          %s406 = sand.u32 %s121, 1
          %s407 = scalar_lea.vmem [#allocation7], %s406
          %408 = dma.done %s405, 16
        $region56: #{tpu_custom_call.1} parent=51 // pred_fallthru
          _
        // Predicated region
        $region57: #{tpu_custom_call.1} parent=51 // pred_check
          %p409 = pneg %p164
        $region58: #{tpu_custom_call.1} parent=51 // pred_check_branch
          %411 = sbr.rel (%p409) target = $region60
        $region59: #{tpu_custom_call.1} parent=51 // pred_region
          %s412 = sand.u32 %s149, 1
          %s413 = scalar_lea.sflag [#allocation9], %s412
          %s414 = sand.u32 %s149, 1
          %s415 = scalar_lea.vmem [#allocation8], %s414
          %416 = dma.done %s413, 16
        $region60: #{tpu_custom_call.1} parent=51 // pred_fallthru
          _
      $region52: #{tpu_custom_call.1} parent=5 // pred_fallthru
        _
    $region6: #{tpu_custom_call.1} parent=1 // loop_footer
      %s26 = sadd.s32 1, %s22
    $region7: #{tpu_custom_call.1} parent=1 // loop_footer_branch
      %21 = sbr.rel target = $region3
    $region8: #{tpu_custom_call.1} parent=1 // loop_exit
      _
    %417 = vsyncpa [#allocation3], 1
    %s418 = scalar_lea.sflag [#allocation3], 1
    %419 = vsyncpa %s418, 1
    %420 = vsyncpa [#allocation6], 1
    %s421 = scalar_lea.sflag [#allocation6], 1
    %422 = vsyncpa %s421, 1
    %423 = vsyncpa [#allocation4], 1
    %s424 = scalar_lea.sflag [#allocation4], 1
    %425 = vsyncpa %s424, 1
    %426 = vsyncpa [#allocation9], 1
    %s427 = scalar_lea.sflag [#allocation9], 1
    %428 = vsyncpa %s427, 1

</llo_original>
